<compile_context>
chip_gen: v7x
topology: tpu7x:2x2x1
jax: 0.10.0
libtpu: 0.0.40
codegen_flags: <defaults>
</compile_context>

<pallas_src>
import jax
import jax.numpy as jnp
from jax.experimental import pallas as pl
from jax.experimental.pallas import tpu as pltpu

_LANE = 128
_SUBLANE = 8
_MIB = 1024 * 1024


def _round_up(x, m):
    return (x + m - 1) // m * m


def _row_lse_kernel(logits_ref, lse_ref):
    """One (tile_n, C) logits tile -> per-row logsumexp, f32 (tile_n, 1)."""
    x = logits_ref[...].astype(jnp.float32)                  # (tile_n, C)
    m = jnp.max(x, axis=-1, keepdims=True)                   # (tile_n, 1)
    s = jnp.sum(jnp.exp(x - m), axis=-1, keepdims=True)      # (tile_n, 1)
    lse_ref[...] = m + jnp.log(s)


def _vmem_budget_bytes():
    """Physical VMEM, with a fallback that is safe on every TPU generation."""
    try:
        return int(pltpu.get_tpu_info().vmem_capacity_bytes)
    except Exception:
        return 64 * _MIB           # v7x per-TC size; conservative everywhere


def cross_entropy_with_weights(y_pred, y_true, class_weights, *, tile_n=None):
    """y_pred: (N, C) float; y_true: (N,) int; class_weights: (C,) float -> scalar f32."""
    n, c = y_pred.shape
    itemsize = jnp.dtype(y_pred.dtype).itemsize
    c_phys = _round_up(c, _LANE)                       # physical lane footprint per row
    row_round = max(_SUBLANE, 32 // itemsize)          # 8 rows for f32, 16 for bf16

    # Generation-aware tile sizing: leave 16 MiB headroom, cap the scoped limit,
    # and budget ~8x the DMA tile for double-buffering + f32 upcast/exp temps.
    vmem_cap = _vmem_budget_bytes()
    vmem_limit = max(min(vmem_cap - 16 * _MIB, 100 * _MIB), 32 * _MIB)
    if tile_n is None:
        target_tile_bytes = vmem_limit // 8            # ~12 MiB v5e/v6e, ~6 MiB v7x
        tile_n = target_tile_bytes // (c_phys * itemsize)
    tile_n = max(row_round, (int(tile_n) // row_round) * row_round)
    tile_n = min(tile_n, _round_up(n, row_round))
    grid = (pl.cdiv(n, tile_n),)

    # Kernel: stream (tile_n, C) logits tiles, emit per-row logsumexp.
    lse = pl.pallas_call(
        _row_lse_kernel,
        out_shape=jax.ShapeDtypeStruct((n, 1), jnp.float32),
        grid=grid,
        in_specs=[pl.BlockSpec((tile_n, c), lambda i: (i, 0))],
        out_specs=pl.BlockSpec((tile_n, 1), lambda i: (i, 0)),
        compiler_params=pltpu.CompilerParams(
            dimension_semantics=("parallel",),         # batch tiles across TCs on v7x
            vmem_limit_bytes=int(vmem_limit),
        ),
    )(y_pred)

    # O(N) gathers + final reduction in XLA (negligible vs. the (N, C) stream).
    y_true_i32 = y_true.astype(jnp.int32)
    w = class_weights.astype(jnp.float32)[y_true_i32]                        # (N,)
    t = jnp.take_along_axis(y_pred, y_true_i32[:, None], axis=1)[:, 0]       # (N,)
    per_sample = w * (lse[:, 0] - t.astype(jnp.float32))                     # w * CE
    # torch.mean(w * CE): divide by global N (not sum of weights).
    return jnp.sum(per_sample) / jnp.float32(n)


def _reference(y_pred, y_true, class_weights):
    logp = jax.nn.log_softmax(y_pred.astype(jnp.float32), axis=-1)
    ce = -jnp.take_along_axis(logp, y_true[:, None], axis=-1)[:, 0]
    w = class_weights.astype(jnp.float32)[y_true]
    return jnp.mean(w * ce)


if __name__ == "__main__":
    key = jax.random.PRNGKey(0)
    k1, k2, k3, k4, k5, k6 = jax.random.split(key, 6)

    # Test 1: small shapes consistent with the module (batch=8, 32 classes).
    N, C = 8, 32
    y_pred = jax.random.normal(k1, (N, C), dtype=jnp.float32)
    y_true = jax.random.randint(k2, (N,), 0, C, dtype=jnp.int32)
    class_weights = 0.5 + jnp.arange(C, dtype=jnp.float32) / C   # stand-in for ctor `weigths`
    loss = cross_entropy_with_weights(y_pred, y_true, class_weights)
    jax.block_until_ready(loss)
    ref = _reference(y_pred, y_true, class_weights)
    assert jnp.allclose(loss, ref, rtol=1e-5, atol=1e-5), (loss, ref)

    # Test 2: multi-tile grid + ragged last row-tile + non-128-multiple C.
    N2, C2 = 20, 200
    y_pred2 = jax.random.normal(k3, (N2, C2), dtype=jnp.float32)
    y_true2 = jax.random.randint(k4, (N2,), 0, C2, dtype=jnp.int32)
    class_weights2 = 0.25 + jnp.arange(C2, dtype=jnp.float32) / C2
    loss2 = cross_entropy_with_weights(y_pred2, y_true2, class_weights2, tile_n=8)
    jax.block_until_ready(loss2)
    ref2 = _reference(y_pred2, y_true2, class_weights2)
    assert jnp.allclose(loss2, ref2, rtol=1e-5, atol=1e-5), (loss2, ref2)

    # Test 3: bf16 logits path (in-kernel f32 upcast, 16-row sublane rounding).
    N3, C3 = 32, 160
    y_pred3 = jax.random.normal(k5, (N3, C3), dtype=jnp.float32).astype(jnp.bfloat16)
    y_true3 = jax.random.randint(k6, (N3,), 0, C3, dtype=jnp.int32)
    class_weights3 = 0.5 + jnp.arange(C3, dtype=jnp.float32) / C3
    loss3 = cross_entropy_with_weights(y_pred3, y_true3, class_weights3)
    jax.block_until_ready(loss3)
    ref3 = _reference(y_pred3.astype(jnp.float32), y_true3, class_weights3)
    assert jnp.allclose(loss3, ref3, rtol=1e-4, atol=1e-4), (loss3, ref3)

    print("KERNEL_OK")
</pallas_src>

<mosaic_0001>
module attributes {stable_mosaic.version = 11 : i64} {
  func.func @_row_lse_kernel(%arg0: i32, %arg1: memref<8x32xf32, #tpu.memory_space<vmem>>, %arg2: memref<8x1xf32, #tpu.memory_space<vmem>>) attributes {dimension_semantics = [#tpu.dimension_semantics<parallel>], iteration_bounds = array<i64: 1>, scalar_prefetch = 0 : i64, scratch_operands = 0 : i64, tpu.core_type = #tpu.core_type<tc>, window_params = [{transform_indices = @transform_0, window_bounds = array<i64: 8, 32>}, {transform_indices = @transform_1, window_bounds = array<i64: 8, 1>}]} {
    %c0 = arith.constant 0 : index
    %c0_0 = arith.constant 0 : index
    %0 = vector.load %arg1[%c0, %c0_0] : memref<8x32xf32, #tpu.memory_space<vmem>>, vector<8x32xf32>
    %cst = arith.constant dense<0xFF800000> : vector<8xf32>
    %1 = vector.multi_reduction <maximumf>, %0, %cst [1] : vector<8x32xf32> to vector<8xf32>
    %2 = vector.shape_cast %1 : vector<8xf32> to vector<8x1xf32>
    %3 = vector.broadcast %2 : vector<8x1xf32> to vector<8x32xf32>
    %4 = arith.subf %0, %3 : vector<8x32xf32>
    %5 = math.exp %4 : vector<8x32xf32>
    %cst_1 = arith.constant dense<0.000000e+00> : vector<8xf32>
    %6 = vector.multi_reduction <add>, %5, %cst_1 [1] : vector<8x32xf32> to vector<8xf32>
    %7 = vector.shape_cast %6 : vector<8xf32> to vector<8x1xf32>
    %8 = math.log %7 : vector<8x1xf32>
    %9 = arith.addf %2, %8 : vector<8x1xf32>
    %c0_2 = arith.constant 0 : index
    %c0_3 = arith.constant 0 : index
    %10 = vector.load %arg2[%c0_2, %c0_3] : memref<8x1xf32, #tpu.memory_space<vmem>>, vector<8x1xf32>
    tpu.vector_store %arg2[%c0_2, %c0_3], %9 {strides = array<i32>} : memref<8x1xf32, #tpu.memory_space<vmem>>, vector<8x1xf32>,
    return
  }
  func.func @transform_0(%arg0: i32) -> (i32, i32) {
    %c0_i32 = arith.constant 0 : i32
    %c0_i32_0 = arith.constant 0 : i32
    return %arg0, %c0_i32 : i32, i32
  }
  func.func @transform_1(%arg0: i32) -> (i32, i32) {
    %c0_i32 = arith.constant 0 : i32
    %c0_i32_0 = arith.constant 0 : i32
    return %arg0, %c0_i32 : i32, i32
  }
}

</mosaic_0001>

<llo_original>
// kernel: tpu_custom_call.1
$region0: #{tpu_custom_call.1}
  #allocation0 [shape = 'u32[]', space=smem, size = 0x4, offset = 0x4, fixed_abs, tag = 'smem constant byte address 0x4 - core index']
  #allocation1 [shape = 'u32[144,128]{1,0:T(1,128)}', space=vmem, size = 0x12000, scoped, tag = 'internal scratch']
  %s0 = inlined_call_operand.hbm [shape: f32[8,32], index: 0, kind: input, shape index: {}]
  %s1 = inlined_call_operand.vmem [shape: f32[8,1], index: 1, kind: output, shape index: {}]
  %s2 = sld [smem:[#allocation0]]
  $region18: #{tpu_custom_call.1} parent=0
    _
  %s4 = ssub.s32 1, %s2
  %s5 = scalar_select 0, %s4, %s2
  $region1: #{tpu_custom_call.1} parent=0
    #allocation2 [shape = 'u8[4096]{0}', space=vmem, size = 0x1000, scoped, tag = 'input window, operand 0, single buffered']
    #allocation3 [shape = 's32[1]{0}', space=sflag, size = 0x4, scoped, tag = 'scoped memory for tpu_custom_call.1']
    %6 = vsyncpa [#allocation3], 0
    // Predicated region
    $region2: #{tpu_custom_call.1} parent=1 // pred_check
      _
    $region3: #{tpu_custom_call.1} parent=1 // pred_check_branch
      %8 = sbr.rel (0) target = $region5
    $region4: #{tpu_custom_call.1} parent=1 // pred_region
      %s10 = ssub.s32 128, 128
      %11 = vsyncadd [#allocation3], %s10
      %s13 = sshll.u32 [#allocation2], 4
      %s14 = int_to_ptr.vmem [resolvable:$true] %s13
      %16 = dma.hbm_to_vmem [thread:$0]  %s0, 128, %s14, [#allocation3]
    $region5: #{tpu_custom_call.1} parent=1 // pred_fallthru
      _
    // Predicated region
    $region6: #{tpu_custom_call.1} parent=1 // pred_check
      _
    $region7: #{tpu_custom_call.1} parent=1 // pred_check_branch
      %18 = sbr.rel (0) target = $region9
    $region8: #{tpu_custom_call.1} parent=1 // pred_region
      %19 = dma.done [#allocation3], 128
    $region9: #{tpu_custom_call.1} parent=1 // pred_fallthru
      _
    %v20 = vld [vmem:[#allocation2] sm:$0xff]
    %vm21 = vcmask 261120
    %v22 = vsel %vm21, %v20, -inf
    %23 = vmax.xlane.f32.xlu0 %v22
    %v24 = vpop.xlane.xlu0 %23
    %v25 = vsub.f32 %v20, %v24
    %v26 = vmul.f32 %v25, 1.442695
    %v27 = vpow.pop %v26
    %v28 = vsel %vm21, %v27, 0.0
    %29 = vadd.xlane.f32.xlu0 %v28
    %v30 = vpop.xlane.xlu0 %29
    %v31 = vlog2.pop %v30
    %v32 = vmul.f32 %v31, 0.6931472
    %v33 = vadd.f32 %v24, %v32
    %vm34 = vcmask 7168
    %35 = vst.msk [vmem:[%s1] sm:$0xff] %vm34, %v33
    // Predicated region
    $region10: #{tpu_custom_call.1} parent=1 // pred_check
      _
    $region11: #{tpu_custom_call.1} parent=1 // pred_check_branch
      %37 = sbr.rel (0) target = $region13
    $region12: #{tpu_custom_call.1} parent=1 // pred_region
      _
    $region13: #{tpu_custom_call.1} parent=1 // pred_fallthru
      _
    // Predicated region
    $region14: #{tpu_custom_call.1} parent=1 // pred_check
      _
    $region15: #{tpu_custom_call.1} parent=1 // pred_check_branch
      %39 = sbr.rel (0) target = $region17
    $region16: #{tpu_custom_call.1} parent=1 // pred_region
      _
    $region17: #{tpu_custom_call.1} parent=1 // pred_fallthru
      _
    %40 = vsyncpa [#allocation3], 1

</llo_original>
